<compile_context>
chip_gen: v6e
topology: v6e:2x2x1
jax: 0.10.0
libtpu: 0.0.40
codegen_flags: <defaults>
</compile_context>

<pallas_src>
import functools

import jax
import jax.numpy as jnp
from jax import lax
from jax.experimental import pallas as pl
from jax.experimental.pallas import tpu as pltpu


# --------------------------------------------------------------------------- #
# Kernels
# --------------------------------------------------------------------------- #
def _ctx_single_kernel(x_ref, ctx_ref, *, inv_seq_len):
    # Whole sequence in one tile: direct streaming mean, no scratch, no
    # predicated regions.  Upcast fused into the reduction.
    s = jnp.sum(x_ref[...], axis=1, dtype=jnp.float32)
    ctx_ref[...] = (s * inv_seq_len).astype(ctx_ref.dtype)


def _ctx_reduce_kernel(x_ref, ctx_ref, acc_ref, *, inv_seq_len, seq_len, ts,
                       needs_mask):
    # x_ref:   (TB, TS, TH) input slab
    # ctx_ref: (TB, TH)     output tile (resident across the seq grid axis)
    # acc_ref: (TB, TH)     float32 accumulator scratch
    s = pl.program_id(2)

    @pl.when(s == 0)
    def _():
        acc_ref[...] = jnp.zeros_like(acc_ref)

    x = x_ref[...]
    if needs_mask:
        # Tail seq tile over-reads past S: zero the invalid rows before summing.
        seq_idx = lax.broadcasted_iota(jnp.int32, (1, ts, 1), 1) + s * ts
        x = jnp.where(seq_idx < seq_len, x, jnp.zeros_like(x))
    acc_ref[...] += jnp.sum(x, axis=1, dtype=jnp.float32)

    @pl.when(s == pl.num_programs(2) - 1)
    def _():
        ctx_ref[...] = (acc_ref[...] * inv_seq_len).astype(ctx_ref.dtype)


# --------------------------------------------------------------------------- #
# Wrapper
# --------------------------------------------------------------------------- #
def _round_up(x, m):
    return ((x + m - 1) // m) * m


def _cdiv(a, b):
    return -(-a // b)


def _vmem_capacity_bytes():
    try:
        info = pltpu.get_tpu_info()
        cap = int(getattr(info, "vmem_capacity_bytes", 0) or 0)
        if cap > 0:
            return cap
    except Exception:
        pass
    # Conservative fallback (v7x per-TC size); safe on every generation.
    return 64 * 1024 * 1024


def uniform_attention(hidden_states, *, seq_tile=None):
    """hidden_states: (B, S, H) -> (context (B, H), weights (B, S, 1) f32)."""
    B, S, H = hidden_states.shape
    dtype = hidden_states.dtype
    itemsize = jnp.dtype(dtype).itemsize
    # Sublane packing factor: f32 -> 8, bf16 -> 16, int8/fp8 -> 32.
    pack = max(8, 8 * (4 // itemsize))

    vmem_cap = _vmem_capacity_bytes()
    budget = int(vmem_cap * 0.70)        # double-buffered input-tile budget

    # ---- hidden split: give v7x's 2nd TensorCore work when batch can't ------
    if B <= 8 and H % 256 == 0:
        TH = H // 2                       # two lane-aligned (mult-of-128) chunks
    else:
        TH = H
    h_blocks = H // TH

    # ---- batch tile ----------------------------------------------------------
    TB = B if B < 8 else 8                # full dim (<8) or sublane-aligned 8

    # ---- seq tile (reduction axis, last in grid) -----------------------------
    def _max_ts(buffers):
        mt = budget // (buffers * TB * TH * itemsize)
        return max(pack, (mt // pack) * pack)

    if seq_tile is None:
        TS = _max_ts(2)
    else:                                 # test/debug override
        TS = max(pack, (int(seq_tile) // pack) * pack)

    if S <= TS:
        TS = S                            # single tile: full-dim block, no mask
        single_tile = True
        needs_mask = False
        if B > 8:
            # Grow TB (multiples of 8) while staying in budget; keep >= 2 batch
            # blocks so both v7x TensorCores get work.
            tb_fit = (budget // (2 * (TS + 2) * TH * itemsize)) // 8 * 8
            tb_cap = max(8, _round_up(_cdiv(B, 2), 8))
            TB = max(8, min(max(tb_fit, 8), tb_cap))
    else:
        single_tile = False
        if seq_tile is None and S % TS != 0:
            # Tail tile will be masked in-kernel; leave headroom for the masked
            # intermediate by budgeting 3 tile-sized buffers instead of 2.
            TS = _max_ts(3)
        needs_mask = (S % TS) != 0

    b_blocks = _cdiv(B, TB)
    s_blocks = 1 if single_tile else _cdiv(S, TS)

    # ---- VMEM limit from the actual footprint --------------------------------
    in_tile = TB * TS * TH * itemsize
    out_tile = TB * TH * itemsize
    acc_tile = 0 if single_tile else TB * TH * 4
    footprint = 2 * in_tile + 2 * out_tile + acc_tile
    if not single_tile and needs_mask:
        footprint += in_tile              # room for the masked intermediate
    vmem_limit = max(footprint + (8 << 20), 32 << 20)
    vmem_limit = int(min(vmem_limit, int(vmem_cap * 0.9)))
    vmem_limit = int(max(vmem_limit, footprint + (1 << 20)))

    cost = pl.CostEstimate(
        flops=B * S * H + B * H,
        transcendentals=0,
        bytes_accessed=B * S * H * itemsize + B * H * itemsize,
    )

    inv_seq_len = float(1.0 / S)

    if single_tile:
        kernel = functools.partial(_ctx_single_kernel, inv_seq_len=inv_seq_len)
        context = pl.pallas_call(
            kernel,
            grid=(b_blocks, h_blocks),
            in_specs=[pl.BlockSpec((TB, TS, TH), lambda b, h: (b, 0, h))],
            out_specs=pl.BlockSpec((TB, TH), lambda b, h: (b, h)),
            out_shape=jax.ShapeDtypeStruct((B, H), dtype),
            compiler_params=pltpu.CompilerParams(
                dimension_semantics=("parallel", "parallel"),
                vmem_limit_bytes=vmem_limit,
            ),
            cost_estimate=cost,
        )(hidden_states)
    else:
        kernel = functools.partial(
            _ctx_reduce_kernel,
            inv_seq_len=inv_seq_len,
            seq_len=S,
            ts=TS,
            needs_mask=needs_mask,
        )
        context = pl.pallas_call(
            kernel,
            grid=(b_blocks, h_blocks, s_blocks),
            in_specs=[pl.BlockSpec((TB, TS, TH), lambda b, h, s: (b, s, h))],
            out_specs=pl.BlockSpec((TB, TH), lambda b, h, s: (b, h)),
            out_shape=jax.ShapeDtypeStruct((B, H), dtype),
            scratch_shapes=[pltpu.VMEM((TB, TH), jnp.float32)],
            compiler_params=pltpu.CompilerParams(
                dimension_semantics=("parallel", "parallel", "arbitrary"),
                vmem_limit_bytes=vmem_limit,
            ),
            cost_estimate=cost,
        )(hidden_states)

    # Attention weights are a compile-time constant -> built in the wrapper
    # (float32, matching torch.ones(...)/seq_len).
    weights = jnp.full((B, S, 1), 1.0 / S, dtype=jnp.float32)
    return context, weights


# --------------------------------------------------------------------------- #
# Self-test
# --------------------------------------------------------------------------- #
if __name__ == "__main__":
    # Module has no learnable parameters (hidden_size only records shape).
    key = jax.random.PRNGKey(0)

    # 1) Small canonical shape -> single-tile fast path.
    B, S, H = 2, 8, 32
    hidden_states = jax.random.normal(key, (B, S, H), dtype=jnp.float32)
    context, weights = uniform_attention(hidden_states)
    context = jax.block_until_ready(context)
    weights = jax.block_until_ready(weights)

    ref_w = jnp.ones((B, S, 1), jnp.float32) / S
    ref_ctx = jnp.sum(ref_w * hidden_states, axis=1)
    assert jnp.allclose(context, ref_ctx, atol=1e-5, rtol=1e-5)
    assert jnp.allclose(weights, ref_w, atol=1e-6, rtol=1e-6)

    # 2) Ragged shape with a forced small seq tile -> exercises the multi-tile
    #    reduction path (f32 accumulator, masked tail tile, partial batch block).
    B2, S2, H2 = 10, 13, 32
    x2 = jax.random.normal(jax.random.PRNGKey(1), (B2, S2, H2), dtype=jnp.float32)
    ctx2, w2 = uniform_attention(x2, seq_tile=8)
    ctx2 = jax.block_until_ready(ctx2)
    ref_ctx2 = jnp.sum((jnp.ones((B2, S2, 1), jnp.float32) / S2) * x2, axis=1)
    assert jnp.allclose(ctx2, ref_ctx2, atol=1e-5, rtol=1e-5)
    assert jnp.allclose(w2, jnp.full((B2, S2, 1), 1.0 / S2, jnp.float32))

    print("KERNEL_OK")
</pallas_src>

<mosaic_0001>
module attributes {stable_mosaic.version = 11 : i64} {
  func.func @_ctx_single_kernel(%arg0: i32, %arg1: i32, %arg2: memref<2x8x32xf32, #tpu.memory_space<vmem>>, %arg3: memref<2x32xf32, #tpu.memory_space<vmem>>) attributes {dimension_semantics = [#tpu.dimension_semantics<parallel>, #tpu.dimension_semantics<parallel>], iteration_bounds = array<i64: 1, 1>, scalar_prefetch = 0 : i64, scratch_operands = 0 : i64, tpu.core_type = #tpu.core_type<tc>, window_params = [{transform_indices = @transform_0, window_bounds = array<i64: 2, 8, 32>}, {transform_indices = @transform_1, window_bounds = array<i64: 2, 32>}]} {
    %c0 = arith.constant 0 : index
    %c0_0 = arith.constant 0 : index
    %c0_1 = arith.constant 0 : index
    %0 = vector.load %arg2[%c0, %c0_0, %c0_1] : memref<2x8x32xf32, #tpu.memory_space<vmem>>, vector<2x8x32xf32>
    %cst = arith.constant dense<0.000000e+00> : vector<2x32xf32>
    %1 = vector.multi_reduction <add>, %0, %cst [1] : vector<2x8x32xf32> to vector<2x32xf32>
    %cst_2 = arith.constant 1.250000e-01 : f32
    %2 = vector.broadcast %cst_2 : f32 to vector<2x32xf32>
    %3 = arith.mulf %1, %2 : vector<2x32xf32>
    %c0_3 = arith.constant 0 : index
    %c0_4 = arith.constant 0 : index
    %4 = vector.load %arg3[%c0_3, %c0_4] : memref<2x32xf32, #tpu.memory_space<vmem>>, vector<2x32xf32>
    tpu.vector_store %arg3[%c0_3, %c0_4], %3 {strides = array<i32>} : memref<2x32xf32, #tpu.memory_space<vmem>>, vector<2x32xf32>,
    return
  }
  func.func @transform_0(%arg0: i32, %arg1: i32) -> (i32, i32, i32) {
    %c0_i32 = arith.constant 0 : i32
    %c0_i32_0 = arith.constant 0 : i32
    return %arg0, %c0_i32, %arg1 : i32, i32, i32
  }
  func.func @transform_1(%arg0: i32, %arg1: i32) -> (i32, i32) {
    %c0_i32 = arith.constant 0 : i32
    return %arg0, %arg1 : i32, i32
  }
}

</mosaic_0001>

<llo_original>
// kernel: tpu_custom_call.1
$region0: #{tpu_custom_call.1}
  #allocation0 [shape = 'u32[]', space=smem, size = 0x4, offset = 0x4, fixed_abs, tag = 'smem constant byte address 0x4 - core index']
  #allocation1 [shape = 'u32[144,128]{1,0:T(1,128)}', space=vmem, size = 0x12000, scoped, tag = 'internal scratch']
  %s0 = inlined_call_operand.hbm [shape: f32[2,8,32], index: 0, kind: input, shape index: {}]
  %s1 = inlined_call_operand.hbm [shape: f32[2,32], index: 1, kind: output, shape index: {}]
  %s2 = sld [smem:[#allocation0]]
  $region18: #{tpu_custom_call.1} parent=0
    _
  %s4 = ssub.s32 1, %s2
  %s5 = scalar_select 0, %s4, %s2
  $region1: #{tpu_custom_call.1} parent=0
    #allocation2 [shape = 'u8[8192]{0}', space=vmem, size = 0x2000, scoped, tag = 'input window, operand 0, single buffered']
    #allocation3 [shape = 's32[1]{0}', space=sflag, size = 0x4, scoped, tag = 'scoped memory for tpu_custom_call.1']
    #allocation4 [shape = 's32[1]{0}', space=sflag, size = 0x4, scoped, tag = 'scoped memory for tpu_custom_call.1']
    #allocation5 [shape = 'u8[1024]{0}', space=vmem, size = 0x400, scoped, tag = 'output window, operand 0, single buffered']
    %6 = vsyncpa [#allocation3], 0
    %7 = vsyncpa [#allocation4], 0
    // Predicated region
    $region2: #{tpu_custom_call.1} parent=1 // pred_check
      _
    $region3: #{tpu_custom_call.1} parent=1 // pred_check_branch
      %9 = sbr.rel (0) target = $region5
    $region4: #{tpu_custom_call.1} parent=1 // pred_region
      %s11 = ssub.s32 256, 256
      %12 = vsyncadd [#allocation3], %s11
      %s13 = sshll.u32 [#allocation2], 4
      %s14 = int_to_ptr.vmem [resolvable:$true] %s13
      %19 = dma.hbm_to_vmem [thread:$0]  %s0, 256, %s14, [#allocation3], 128, 128, 8
    $region5: #{tpu_custom_call.1} parent=1 // pred_fallthru
      _
    // Predicated region
    $region6: #{tpu_custom_call.1} parent=1 // pred_check
      _
    $region7: #{tpu_custom_call.1} parent=1 // pred_check_branch
      %21 = sbr.rel (0) target = $region9
    $region8: #{tpu_custom_call.1} parent=1 // pred_region
      %22 = dma.done [#allocation3], 256
    $region9: #{tpu_custom_call.1} parent=1 // pred_fallthru
      _
    %v23 = vld [vmem:[#allocation2] sm:$0xff]
    %v24 = vld [vmem:[#allocation2 + $0x8] sm:$0xff]
    %vm25 = vcmask 261120
    %v26 = vsel %vm25, %v23, 0.0
    %v27 = vrot.slane %v26, 4
    %v28 = vadd.f32 %v26, %v27
    %v29 = vrot.slane %v28, 2
    %v30 = vadd.f32 %v28, %v29
    %v31 = vrot.slane %v30, 1
    %v32 = vadd.f32 %v30, %v31
    %v33 = vsel %vm25, %v24, 0.0
    %v34 = vrot.slane %v33, 4
    %v35 = vadd.f32 %v33, %v34
    %v36 = vrot.slane %v35, 2
    %v37 = vadd.f32 %v35, %v36
    %v38 = vrot.slane %v37, 1
    %v39 = vadd.f32 %v37, %v38
    %v40 = vmul.f32 %v32, 0.125
    %v41 = vmul.f32 %v39, 0.125
    %vm44 = vcmask 1041409
    %v45 = vsel %vm44, %v41, %v40
    %vm47 = vcmask 254976
    %48 = vst.msk [vmem:[#allocation5] sm:$0x3] %vm47, %v45
    // Predicated region
    $region10: #{tpu_custom_call.1} parent=1 // pred_check
      _
    $region11: #{tpu_custom_call.1} parent=1 // pred_check_branch
      %50 = sbr.rel (0) target = $region13
    $region12: #{tpu_custom_call.1} parent=1 // pred_region
      %s52 = ssub.s32 32, 32
      %53 = vsyncadd [#allocation4], %s52
      %s55 = sshll.u32 [#allocation5], 4
      %s56 = int_to_ptr.vmem [resolvable:$true] %s55
      %58 = dma.vmem_to_hbm [thread:$0]  %s56, 32, %s1, [#allocation4]
    $region13: #{tpu_custom_call.1} parent=1 // pred_fallthru
      _
    // Predicated region
    $region14: #{tpu_custom_call.1} parent=1 // pred_check
      _
    $region15: #{tpu_custom_call.1} parent=1 // pred_check_branch
      %60 = sbr.rel (0) target = $region17
    $region16: #{tpu_custom_call.1} parent=1 // pred_region
      %61 = dma.done [#allocation4], 32
    $region17: #{tpu_custom_call.1} parent=1 // pred_fallthru
      _
    %62 = vsyncpa [#allocation3], 1
    %63 = vsyncpa [#allocation4], 1

</llo_original>
